<compile_context>
chip_gen: v5e
topology: v5e:2x2
jax: 0.10.0
libtpu: 0.0.40
codegen_flags: <defaults>
</compile_context>

<pallas_src>
import jax
import jax.numpy as jnp
from jax.experimental import pallas as pl
from jax.experimental.pallas import tpu as pltpu


def _linear_relu_kernel(x_ref, w_ref, b_ref, o_ref):
    # x_ref: (TM, K) f32, w_ref: (K, D_out) bf16 (or f32), b_ref: (1, D_out) f32,
    # o_ref: (TM, D_out).  x is cast in-kernel (VPU); bf16 x bf16 -> f32 accumulation
    # on the MXU via preferred_element_type.
    x = x_ref[...].astype(w_ref.dtype)
    y = jnp.dot(x, w_ref[...], preferred_element_type=jnp.float32)
    y = y + b_ref[...]                       # broadcast bias over rows (f32)
    o_ref[...] = jnp.maximum(y, 0.0).astype(o_ref.dtype)


def _round_up(n, m):
    return ((n + m - 1) // m) * m


def prepare_client_params(weight, bias, *, compute_dtype=jnp.bfloat16):
    """One-time parameter prep (NOT paid per forward call):
      - transpose PyTorch-layout (D_out, D_in) weight to (D_in, D_out) for the MXU,
      - cast to compute_dtype (bf16 default; pass jnp.float32 for bit-closer parity with
        the f32 PyTorch client, e.g. if gradients flow through the cut layer).
    Bias stays f32, reshaped to (1, D_out) for TPU 2-D layout.
    No contraction-dim padding: the kernel takes K at its natural size (full-extent
    BlockSpec), since the kernel is memory/overhead bound, not MXU bound."""
    d_out, d_in = weight.shape
    w_t = weight.T.astype(compute_dtype)                 # (D_in, D_out)
    b2d = bias.reshape(1, d_out).astype(jnp.float32)
    return w_t, b2d


def client_forward(x, w_prepared, bias2d, *, out_dtype=jnp.float32, tm_cap=512):
    """Pallas equivalent of ClientModel.forward: relu(x @ weight.T + bias).

    x:          (B, D_in) float32 (unpadded; cast to the weight dtype inside the kernel)
    w_prepared: (D_in, D_out)      from prepare_client_params
    bias2d:     (1, D_out) float32 from prepare_client_params
    out_dtype:  jnp.float32 (PyTorch parity) or jnp.bfloat16 (halves activation bytes
                and the client->server SplitNN payload)
    """
    B, d_in = x.shape
    d_in_w, d_out = w_prepared.shape
    assert d_in == d_in_w, "x feature dim must match prepared weight"

    # Step/tile selection: one grid step unless the batch is large enough that each
    # step still carries hundreds of rows (amortizes the ~0.35 us/step overhead and,
    # on v7x only, makes the megacore split worthwhile).
    n_steps = max(1, -(-B // tm_cap))              # ceil(B / tm_cap), 1 for B <= tm_cap
    tm = _round_up(-(-B // n_steps), 8)            # balanced tile, sublane-aligned
    b_pad = tm * n_steps
    xin = x if b_pad == B else jnp.pad(x, ((0, b_pad - B), (0, 0)))

    out = pl.pallas_call(
        _linear_relu_kernel,
        out_shape=jax.ShapeDtypeStruct((b_pad, d_out), out_dtype),
        grid_spec=pltpu.PrefetchScalarGridSpec(
            num_scalar_prefetch=0,
            grid=(n_steps,),
            in_specs=[
                # x row tile, full (unpadded) contraction dim; streamed, double-buffered.
                pl.BlockSpec((tm, d_in), lambda i: (i, 0)),
                # Full weight / bias are grid-invariant: single-buffer them (no wasted VMEM).
                pl.BlockSpec((d_in, d_out), lambda i: (0, 0),
                             pipeline_mode=pl.Buffered(1)),
                pl.BlockSpec((1, d_out), lambda i: (0, 0),
                             pipeline_mode=pl.Buffered(1)),
            ],
            out_specs=pl.BlockSpec((tm, d_out), lambda i: (i, 0)),
        ),
        compiler_params=pltpu.CompilerParams(
            # No-op on single-TC v5e/v6e; lets v7x shard steps across its 2 TCs when the
            # batch is big enough to produce multiple steps.
            dimension_semantics=("parallel",),
        ),
    )(xin, w_prepared, bias2d)
    return out if b_pad == B else out[:B]


def init_client_params(key, d_in, d_out):
    """Deterministic init mimicking nn.Linear.reset_parameters():
    uniform(-1/sqrt(d_in), 1/sqrt(d_in)) for both weight and bias (PyTorch layout)."""
    kw, kb = jax.random.split(key)
    bound = 1.0 / jnp.sqrt(jnp.float32(d_in))
    weight = jax.random.uniform(kw, (d_out, d_in), jnp.float32, -bound, bound)
    bias = jax.random.uniform(kb, (d_out,), jnp.float32, -bound, bound)
    return weight, bias


if __name__ == "__main__":
    key = jax.random.PRNGKey(0)
    kx, kp = jax.random.split(key)

    B, D_IN, D_OUT = 64, 784, 128          # MNIST-style flattened input, small cut width
    x = jax.random.normal(kx, (B, D_IN), jnp.float32)
    weight, bias = init_client_params(kp, D_IN, D_OUT)

    # One-time prep (transpose + bf16), then forward: single grid step, no wrapper pad/cast.
    w_prep, b_prep = prepare_client_params(weight, bias)
    out = client_forward(x, w_prep, b_prep)
    out = jax.block_until_ready(out)
    assert out.shape == (B, D_OUT)

    # Reference check 1: same bf16-rounded operands, f32 math (tight).
    xq = x.astype(jnp.bfloat16).astype(jnp.float32)
    wq = weight.astype(jnp.bfloat16).astype(jnp.float32)
    ref_bf16 = jnp.maximum(xq @ wq.T + bias, 0.0)
    assert jnp.allclose(out, ref_bf16, atol=1e-3, rtol=1e-3)

    # Reference check 2: full-precision reference (loose, bounds bf16 rounding).
    ref_full = jnp.maximum(x @ weight.T + bias, 0.0)
    assert jnp.allclose(out, ref_full, atol=5e-2, rtol=5e-2)

    # Awkward batch (not a multiple of 8): padded-and-trimmed path instead of asserting.
    B2 = 100
    x2 = jax.random.normal(jax.random.PRNGKey(1), (B2, D_IN), jnp.float32)
    out2 = jax.block_until_ready(client_forward(x2, w_prep, b_prep))
    ref2 = jnp.maximum(x2 @ weight.T + bias, 0.0)
    assert out2.shape == (B2, D_OUT)
    assert jnp.allclose(out2, ref2, atol=5e-2, rtol=5e-2)

    print("KERNEL_OK")
</pallas_src>

<mosaic_0001>
module attributes {stable_mosaic.version = 11 : i64} {
  func.func @_linear_relu_kernel(%arg0: i32, %arg1: memref<64x784xf32, #tpu.memory_space<vmem>>, %arg2: memref<784x128xbf16, #tpu.memory_space<vmem>>, %arg3: memref<1x128xf32, #tpu.memory_space<vmem>>, %arg4: memref<64x128xf32, #tpu.memory_space<vmem>>) attributes {dimension_semantics = [#tpu.dimension_semantics<parallel>], iteration_bounds = array<i64: 1>, scalar_prefetch = 0 : i64, scratch_operands = 0 : i64, tpu.core_type = #tpu.core_type<tc>, window_params = [{transform_indices = @transform_0, window_bounds = array<i64: 64, 784>}, {pipeline_mode = #tpu.pipeline_mode<synchronous>, transform_indices = @transform_1, window_bounds = array<i64: 784, 128>}, {pipeline_mode = #tpu.pipeline_mode<synchronous>, transform_indices = @transform_2, window_bounds = array<i64: 1, 128>}, {transform_indices = @transform_3, window_bounds = array<i64: 64, 128>}]} {
    %c0 = arith.constant 0 : index
    %c0_0 = arith.constant 0 : index
    %0 = vector.load %arg1[%c0, %c0_0] : memref<64x784xf32, #tpu.memory_space<vmem>>, vector<64x784xf32>
    %1 = arith.truncf %0 : vector<64x784xf32> to vector<64x784xbf16>
    %c0_1 = arith.constant 0 : index
    %c0_2 = arith.constant 0 : index
    %2 = vector.load %arg2[%c0_1, %c0_2] : memref<784x128xbf16, #tpu.memory_space<vmem>>, vector<784x128xbf16>
    %cst = arith.constant dense<0.000000e+00> : vector<64x128xf32>
    %3 = tpu.matmul %1, %2, %cst {dimension_numbers = #tpu.dot_dimension_numbers<[1], [0], [0], [1], [0, 0, 1, 1], [], []>} : vector<64x784xbf16>, vector<784x128xbf16>, vector<64x128xf32> -> vector<64x128xf32>
    %c0_3 = arith.constant 0 : index
    %c0_4 = arith.constant 0 : index
    %4 = vector.load %arg3[%c0_3, %c0_4] : memref<1x128xf32, #tpu.memory_space<vmem>>, vector<1x128xf32>
    %5 = vector.broadcast %4 : vector<1x128xf32> to vector<64x128xf32>
    %6 = arith.addf %3, %5 : vector<64x128xf32>
    %cst_5 = arith.constant 0.000000e+00 : f32
    %7 = vector.broadcast %cst_5 : f32 to vector<64x128xf32>
    %8 = arith.maximumf %6, %7 : vector<64x128xf32>
    %c0_6 = arith.constant 0 : index
    %c0_7 = arith.constant 0 : index
    %9 = vector.load %arg4[%c0_6, %c0_7] : memref<64x128xf32, #tpu.memory_space<vmem>>, vector<64x128xf32>
    tpu.vector_store %arg4[%c0_6, %c0_7], %8 {strides = array<i32>} : memref<64x128xf32, #tpu.memory_space<vmem>>, vector<64x128xf32>,
    return
  }
  func.func @transform_0(%arg0: i32) -> (i32, i32) {
    %c0_i32 = arith.constant 0 : i32
    %c0_i32_0 = arith.constant 0 : i32
    return %arg0, %c0_i32 : i32, i32
  }
  func.func @transform_1(%arg0: i32) -> (i32, i32) {
    %c0_i32 = arith.constant 0 : i32
    %c0_i32_0 = arith.constant 0 : i32
    %c0_i32_1 = arith.constant 0 : i32
    return %c0_i32, %c0_i32_0 : i32, i32
  }
  func.func @transform_2(%arg0: i32) -> (i32, i32) {
    %c0_i32 = arith.constant 0 : i32
    %c0_i32_0 = arith.constant 0 : i32
    %c0_i32_1 = arith.constant 0 : i32
    return %c0_i32, %c0_i32_0 : i32, i32
  }
  func.func @transform_3(%arg0: i32) -> (i32, i32) {
    %c0_i32 = arith.constant 0 : i32
    %c0_i32_0 = arith.constant 0 : i32
    return %arg0, %c0_i32 : i32, i32
  }
}

</mosaic_0001>

<llo_original>
// kernel: tpu_custom_call.1
$region0: #{tpu_custom_call.1}
  #allocation0 [shape = 'u32[]', space=smem, size = 0x4, offset = 0x4, fixed_abs, tag = 'smem constant byte address 0x4 - core index']
  #allocation1 [shape = 'u32[72,128]{1,0:T(1,128)}', space=vmem, size = 0x9000, scoped, tag = 'internal scratch']
  %s0 = inlined_call_operand.hbm [shape: f32[64,784], index: 0, kind: input, shape index: {}]
  %s1 = inlined_call_operand.hbm [shape: bf16[784,128], index: 1, kind: input, shape index: {}]
  %s2 = inlined_call_operand.vmem [shape: f32[1,128], index: 2, kind: input, shape index: {}]
  %s3 = inlined_call_operand.hbm [shape: f32[64,128], index: 3, kind: output, shape index: {}]
  %s4 = sld [smem:[#allocation0]]
  $region30: #{tpu_custom_call.1} parent=0
    _
  %s6 = ssub.s32 1, %s4
  %s7 = scalar_select 0, %s6, %s4
  $region1: #{tpu_custom_call.1} parent=0
    #allocation2 [shape = 'u8[229376]{0}', space=vmem, size = 0x38000, scoped, tag = 'input window, operand 0, single buffered']
    #allocation3 [shape = 's32[1]{0}', space=sflag, size = 0x4, scoped, tag = 'scoped memory for tpu_custom_call.1']
    #allocation4 [shape = 's32[1]{0}', space=sflag, size = 0x4, scoped, tag = 'scoped memory for tpu_custom_call.1']
    #allocation5 [shape = 'u8[200704]{0}', space=vmem, size = 0x31000, scoped, tag = 'input window, operand 1, single buffered']
    #allocation6 [shape = 's32[1]{0}', space=sflag, size = 0x4, scoped, tag = 'scoped memory for tpu_custom_call.1']
    #allocation7 [shape = 'u8[32768]{0}', space=vmem, size = 0x8000, scoped, tag = 'output window, operand 0, single buffered']
    %8 = vsyncpa [#allocation3], 0
    %9 = vsyncpa [#allocation6], 0
    %10 = vsyncpa [#allocation4], 0
    // Predicated region
    $region2: #{tpu_custom_call.1} parent=1 // pred_check
      _
    $region3: #{tpu_custom_call.1} parent=1 // pred_check_branch
      %12 = sbr.rel (0) target = $region5
    $region4: #{tpu_custom_call.1} parent=1 // pred_region
      %14 = vsyncadd [#allocation3], 0
      %s15 = sshll.u32 %s0, 4
      %s16 = int_to_ptr.hbm [resolvable:$true] %s15
      %s17 = sshll.u32 [#allocation2], 4
      %s18 = int_to_ptr.vmem [resolvable:$true] %s17
      %23 = dma.hbm_to_vmem [thread:$0]  %s16, 7168, %s18, [#allocation3], 896, 896, 56
    $region5: #{tpu_custom_call.1} parent=1 // pred_fallthru
      _
    // Predicated region
    $region6: #{tpu_custom_call.1} parent=1 // pred_check
      _
    $region7: #{tpu_custom_call.1} parent=1 // pred_check_branch
      %25 = sbr.rel (0) target = $region9
    $region8: #{tpu_custom_call.1} parent=1 // pred_region
      %27 = vsyncadd [#allocation6], 0
      %s28 = sshll.u32 %s1, 4
      %s29 = int_to_ptr.hbm [resolvable:$true] %s28
      %s30 = sshll.u32 [#allocation5], 4
      %s31 = int_to_ptr.vmem [resolvable:$true] %s30
      %36 = dma.hbm_to_vmem [thread:$0]  %s29, 6272, %s31, [#allocation6], 64, 64, 4
    $region9: #{tpu_custom_call.1} parent=1 // pred_fallthru
      _
    // Predicated region
    $region10: #{tpu_custom_call.1} parent=1 // pred_check
      _
    $region11: #{tpu_custom_call.1} parent=1 // pred_check_branch
      %38 = sbr.rel (0) target = $region13
    $region12: #{tpu_custom_call.1} parent=1 // pred_region
      _
    $region13: #{tpu_custom_call.1} parent=1 // pred_fallthru
      _
    // Predicated region
    $region14: #{tpu_custom_call.1} parent=1 // pred_check
      _
    $region15: #{tpu_custom_call.1} parent=1 // pred_check_branch
      %40 = sbr.rel (0) target = $region17
    $region16: #{tpu_custom_call.1} parent=1 // pred_region
      %42 = dma.done [#allocation3], 7168
    $region17: #{tpu_custom_call.1} parent=1 // pred_fallthru
      _
    // Predicated region
    $region18: #{tpu_custom_call.1} parent=1 // pred_check
      _
    $region19: #{tpu_custom_call.1} parent=1 // pred_check_branch
      %44 = sbr.rel (0) target = $region21
    $region20: #{tpu_custom_call.1} parent=1 // pred_region
      %46 = dma.done [#allocation6], 6272
    $region21: #{tpu_custom_call.1} parent=1 // pred_fallthru
      _
    %v48 = vld [vmem:[#allocation2] sm:$0xff]
    %v49 = vld [vmem:[#allocation2 + $0x8] sm:$0xff]
    %v50 = vld [vmem:[#allocation2 + $0x10] sm:$0xff]
    %v51 = vld [vmem:[#allocation2 + $0x18] sm:$0xff]
    %v52 = vld [vmem:[#allocation2 + $0x20] sm:$0xff]
    %v53 = vld [vmem:[#allocation2 + $0x28] sm:$0xff]
    %v54 = vld [vmem:[#allocation2 + $0x30] sm:$0xff]
    %v55 = vld [vmem:[#allocation2 + $0x38] sm:$0xff]
    %v56 = vld [vmem:[#allocation2 + $0x40] sm:$0xff]
    %v57 = vld [vmem:[#allocation2 + $0x48] sm:$0xff]
    %v58 = vld [vmem:[#allocation2 + $0x50] sm:$0xff]
    %v59 = vld [vmem:[#allocation2 + $0x58] sm:$0xff]
    %v60 = vld [vmem:[#allocation2 + $0x60] sm:$0xff]
    %v61 = vld [vmem:[#allocation2 + $0x68] sm:$0xff]
    %v62 = vld [vmem:[#allocation2 + $0x70] sm:$0xff]
    %v63 = vld [vmem:[#allocation2 + $0x78] sm:$0xff]
    %v64 = vld [vmem:[#allocation2 + $0x80] sm:$0xff]
    %v65 = vld [vmem:[#allocation2 + $0x88] sm:$0xff]
    %v66 = vld [vmem:[#allocation2 + $0x90] sm:$0xff]
    %v67 = vld [vmem:[#allocation2 + $0x98] sm:$0xff]
    %v68 = vld [vmem:[#allocation2 + $0xa0] sm:$0xff]
    %v69 = vld [vmem:[#allocation2 + $0xa8] sm:$0xff]
    %v70 = vld [vmem:[#allocation2 + $0xb0] sm:$0xff]
    %v71 = vld [vmem:[#allocation2 + $0xb8] sm:$0xff]
    %v72 = vld [vmem:[#allocation2 + $0xc0] sm:$0xff]
    %v73 = vld [vmem:[#allocation2 + $0xc8] sm:$0xff]
    %v74 = vld [vmem:[#allocation2 + $0xd0] sm:$0xff]
    %v75 = vld [vmem:[#allocation2 + $0xd8] sm:$0xff]
    %v76 = vld [vmem:[#allocation2 + $0xe0] sm:$0xff]
    %v77 = vld [vmem:[#allocation2 + $0xe8] sm:$0xff]
    %v78 = vld [vmem:[#allocation2 + $0xf0] sm:$0xff]
    %v79 = vld [vmem:[#allocation2 + $0xf8] sm:$0xff]
    %v80 = vld [vmem:[#allocation2 + $0x100] sm:$0xff]
    %v81 = vld [vmem:[#allocation2 + $0x108] sm:$0xff]
    %v82 = vld [vmem:[#allocation2 + $0x110] sm:$0xff]
    %v83 = vld [vmem:[#allocation2 + $0x118] sm:$0xff]
    %v84 = vld [vmem:[#allocation2 + $0x120] sm:$0xff]
    %v85 = vld [vmem:[#allocation2 + $0x128] sm:$0xff]
    %v86 = vld [vmem:[#allocation2 + $0x130] sm:$0xff]
    %v87 = vld [vmem:[#allocation2 + $0x138] sm:$0xff]
    %v88 = vld [vmem:[#allocation2 + $0x140] sm:$0xff]
    %v89 = vld [vmem:[#allocation2 + $0x148] sm:$0xff]
    %v90 = vld [vmem:[#allocation2 + $0x150] sm:$0xff]
    %v91 = vld [vmem:[#allocation2 + $0x158] sm:$0xff]
    %v92 = vld [vmem:[#allocation2 + $0x160] sm:$0xff]
    %v93 = vld [vmem:[#allocation2 + $0x168] sm:$0xff]
    %v94 = vld [vmem:[#allocation2 + $0x170] sm:$0xff]
    %v95 = vld [vmem:[#allocation2 + $0x178] sm:$0xff]
    %v96 = vld [vmem:[#allocation2 + $0x180] sm:$0xff]
    %v97 = vld [vmem:[#allocation2 + $0x188] sm:$0xff]
    %v98 = vld [vmem:[#allocation2 + $0x190] sm:$0xff]
    %v99 = vld [vmem:[#allocation2 + $0x198] sm:$0xff]
    %v100 = vld [vmem:[#allocation2 + $0x1a0] sm:$0xff]
    %v101 = vld [vmem:[#allocation2 + $0x1a8] sm:$0xff]
    %v102 = vld [vmem:[#allocation2 + $0x1b0] sm:$0xff]
    %v103 = vld [vmem:[#allocation2 + $0x1b8] sm:$0xff]
    %v104 = vpack.c.bf16 %v55, %v48
    %v105 = vpack.c.bf16 %v56, %v49
    %v106 = vpack.c.bf16 %v57, %v50
    %v107 = vpack.c.bf16 %v58, %v51
    %v108 = vpack.c.bf16 %v59, %v52
    %v109 = vpack.c.bf16 %v60, %v53
    %v110 = vpack.c.bf16 %v61, %v54
    %v111 = vpack.c.bf16 %v69, %v62
    %v112 = vpack.c.bf16 %v70, %v63
    %v113 = vpack.c.bf16 %v71, %v64
    %v114 = vpack.c.bf16 %v72, %v65
    %v115 = vpack.c.bf16 %v73, %v66
    %v116 = vpack.c.bf16 %v74, %v67
    %v117 = vpack.c.bf16 %v75, %v68
    %v118 = vpack.c.bf16 %v83, %v76
    %v119 = vpack.c.bf16 %v84, %v77
    %v120 = vpack.c.bf16 %v85, %v78
    %v121 = vpack.c.bf16 %v86, %v79
    %v122 = vpack.c.bf16 %v87, %v80
    %v123 = vpack.c.bf16 %v88, %v81
    %v124 = vpack.c.bf16 %v89, %v82
    %v125 = vpack.c.bf16 %v97, %v90
    %v126 = vpack.c.bf16 %v98, %v91
    %v127 = vpack.c.bf16 %v99, %v92
    %v128 = vpack.c.bf16 %v100, %v93
    %v129 = vpack.c.bf16 %v101, %v94
    %v130 = vpack.c.bf16 %v102, %v95
    %v131 = vpack.c.bf16 %v103, %v96
    %v132 = vld [vmem:[#allocation5] sm:$0xf]
    %v133 = vld [vmem:[#allocation5 + $0x4] sm:$0xf]
    %v134 = vld [vmem:[#allocation5 + $0x8] sm:$0xf]
    %v135 = vld [vmem:[#allocation5 + $0xc] sm:$0xf]
    %v136 = vld [vmem:[#allocation5 + $0x10] sm:$0xf]
    %v137 = vld [vmem:[#allocation5 + $0x14] sm:$0xf]
    %v138 = vld [vmem:[#allocation5 + $0x18] sm:$0xf]
    %v139 = vld [vmem:[#allocation5 + $0x1c] sm:$0xf]
    %v140 = vld [vmem:[#allocation5 + $0x20] sm:$0xf]
    %v141 = vld [vmem:[#allocation5 + $0x24] sm:$0xf]
    %v142 = vld [vmem:[#allocation5 + $0x28] sm:$0xf]
    %v143 = vld [vmem:[#allocation5 + $0x2c] sm:$0xf]
    %v144 = vld [vmem:[#allocation5 + $0x30] sm:$0xf]
    %v145 = vld [vmem:[#allocation5 + $0x34] sm:$0xf]
    %v146 = vld [vmem:[#allocation5 + $0x38] sm:$0xf]
    %v147 = vld [vmem:[#allocation5 + $0x3c] sm:$0xf]
    %v148 = vld [vmem:[#allocation5 + $0x40] sm:$0xf]
    %v149 = vld [vmem:[#allocation5 + $0x44] sm:$0xf]
    %v150 = vld [vmem:[#allocation5 + $0x48] sm:$0xf]
    %v151 = vld [vmem:[#allocation5 + $0x4c] sm:$0xf]
    %v152 = vld [vmem:[#allocation5 + $0x50] sm:$0xf]
    %v153 = vld [vmem:[#allocation5 + $0x54] sm:$0xf]
    %v154 = vld [vmem:[#allocation5 + $0x58] sm:$0xf]
    %v155 = vld [vmem:[#allocation5 + $0x5c] sm:$0xf]
    %v156 = vld [vmem:[#allocation5 + $0x60] sm:$0xf]
    %v157 = vld [vmem:[#allocation5 + $0x64] sm:$0xf]
    %v158 = vld [vmem:[#allocation5 + $0x68] sm:$0xf]
    %v159 = vld [vmem:[#allocation5 + $0x6c] sm:$0xf]
    %v160 = vld [vmem:[#allocation5 + $0x70] sm:$0xf]
    %v161 = vld [vmem:[#allocation5 + $0x74] sm:$0xf]
    %v162 = vld [vmem:[#allocation5 + $0x78] sm:$0xf]
    %v163 = vld [vmem:[#allocation5 + $0x7c] sm:$0xf]
    %v164 = vld [vmem:[#allocation5 + $0x80] sm:$0xf]
    %v165 = vld [vmem:[#allocation5 + $0x84] sm:$0xf]
    %v166 = vld [vmem:[#allocation5 + $0x88] sm:$0xf]
    %v167 = vld [vmem:[#allocation5 + $0x8c] sm:$0xf]
    %v168 = vld [vmem:[#allocation5 + $0x90] sm:$0xf]
    %v169 = vld [vmem:[#allocation5 + $0x94] sm:$0xf]
    %v170 = vld [vmem:[#allocation5 + $0x98] sm:$0xf]
    %v171 = vld [vmem:[#allocation5 + $0x9c] sm:$0xf]
    %v172 = vld [vmem:[#allocation5 + $0xa0] sm:$0xf]
    %v173 = vld [vmem:[#allocation5 + $0xa4] sm:$0xf]
    %v174 = vld [vmem:[#allocation5 + $0xa8] sm:$0xf]
    %v175 = vld [vmem:[#allocation5 + $0xac] sm:$0xf]
    %v176 = vld [vmem:[#allocation5 + $0xb0] sm:$0xf]
    %v177 = vld [vmem:[#allocation5 + $0xb4] sm:$0xf]
    %v178 = vld [vmem:[#allocation5 + $0xb8] sm:$0xf]
    %v179 = vld [vmem:[#allocation5 + $0xbc] sm:$0xf]
    %v180 = vld [vmem:[#allocation5 + $0xc0] sm:$0xf]
    %v181 = vld [vmem:[#allocation5 + $0xc4] sm:$0xf]
    %v182 = vld [vmem:[#allocation5 + $0xc8] sm:$0xf]
    %v183 = vld [vmem:[#allocation5 + $0xcc] sm:$0xf]
    %v184 = vld [vmem:[#allocation5 + $0xd0] sm:$0xf]
    %v185 = vld [vmem:[#allocation5 + $0xd4] sm:$0xf]
    %v186 = vld [vmem:[#allocation5 + $0xd8] sm:$0xf]
    %v187 = vld [vmem:[#allocation5 + $0xdc] sm:$0xf]
    %v188 = vld [vmem:[#allocation5 + $0xe0] sm:$0xf]
    %v189 = vld [vmem:[#allocation5 + $0xe4] sm:$0xf]
    %v190 = vld [vmem:[#allocation5 + $0xe8] sm:$0xf]
    %v191 = vld [vmem:[#allocation5 + $0xec] sm:$0xf]
    %v192 = vld [vmem:[#allocation5 + $0xf0] sm:$0xf]
    %v193 = vld [vmem:[#allocation5 + $0xf4] sm:$0xf]
    %v194 = vld [vmem:[#allocation5 + $0xf8] sm:$0xf]
    %v195 = vld [vmem:[#allocation5 + $0xfc] sm:$0xf]
    %v196 = vld [vmem:[#allocation5 + $0x100] sm:$0xf]
    %v197 = vld [vmem:[#allocation5 + $0x104] sm:$0xf]
    %v198 = vld [vmem:[#allocation5 + $0x108] sm:$0xf]
    %v199 = vld [vmem:[#allocation5 + $0x10c] sm:$0xf]
    %v200 = vld [vmem:[#allocation5 + $0x110] sm:$0xf]
    %v201 = vld [vmem:[#allocation5 + $0x114] sm:$0xf]
    %v202 = vld [vmem:[#allocation5 + $0x118] sm:$0xf]
    %v203 = vld [vmem:[#allocation5 + $0x11c] sm:$0xf]
    %v204 = vld [vmem:[#allocation5 + $0x120] sm:$0xf]
    %v205 = vld [vmem:[#allocation5 + $0x124] sm:$0xf]
    %v206 = vld [vmem:[#allocation5 + $0x128] sm:$0xf]
    %v207 = vld [vmem:[#allocation5 + $0x12c] sm:$0xf]
    %v208 = vld [vmem:[#allocation5 + $0x130] sm:$0xf]
    %v209 = vld [vmem:[#allocation5 + $0x134] sm:$0xf]
    %v210 = vld [vmem:[#allocation5 + $0x138] sm:$0xf]
    %v211 = vld [vmem:[#allocation5 + $0x13c] sm:$0xf]
    %v212 = vld [vmem:[#allocation5 + $0x140] sm:$0xf]
    %v213 = vld [vmem:[#allocation5 + $0x144] sm:$0xf]
    %v214 = vld [vmem:[#allocation5 + $0x148] sm:$0xf]
    %v215 = vld [vmem:[#allocation5 + $0x14c] sm:$0xf]
    %v216 = vld [vmem:[#allocation5 + $0x150] sm:$0xf]
    %v217 = vld [vmem:[#allocation5 + $0x154] sm:$0xf]
    %v218 = vld [vmem:[#allocation5 + $0x158] sm:$0xf]
    %v219 = vld [vmem:[#allocation5 + $0x15c] sm:$0xf]
    %v220 = vld [vmem:[#allocation5 + $0x160] sm:$0xf]
    %v221 = vld [vmem:[#allocation5 + $0x164] sm:$0xf]
    %v222 = vld [vmem:[#allocation5 + $0x168] sm:$0xf]
    %v223 = vld [vmem:[#allocation5 + $0x16c] sm:$0xf]
    %v224 = vld [vmem:[#allocation5 + $0x170] sm:$0xf]
    %v225 = vld [vmem:[#allocation5 + $0x174] sm:$0xf]
    %v226 = vld [vmem:[#allocation5 + $0x178] sm:$0xf]
    %v227 = vld [vmem:[#allocation5 + $0x17c] sm:$0xf]
    %v228 = vld [vmem:[#allocation5 + $0x180] sm:$0xf]
    %v229 = vld [vmem:[#allocation5 + $0x184] sm:$0xf]
    %v230 = vld [vmem:[%s2] sm:$0x1]
    %v232 = vperm.slane %v230, 0
    %v332 = vunpack.c.l.b16 %v132
    %v333 = vunpack.c.l.b16 %v133
    %v334 = vunpack.c.l.b16 %v134
    %v335 = vunpack.c.l.b16 %v135
    %v336 = vunpack.c.l.b16 %v136
    %v337 = vunpack.c.l.b16 %v137
    %v338 = vunpack.c.l.b16 %v138
    %v339 = vunpack.c.l.b16 %v139
    %v340 = vunpack.c.l.b16 %v140
    %v341 = vunpack.c.l.b16 %v141
    %v342 = vunpack.c.l.b16 %v142
    %v343 = vunpack.c.l.b16 %v143
    %v344 = vunpack.c.l.b16 %v144
    %v345 = vunpack.c.l.b16 %v145
    %v346 = vunpack.c.l.b16 %v146
    %v347 = vunpack.c.l.b16 %v147
    %v348 = vunpack.c.l.b16 %v148
    %v349 = vunpack.c.l.b16 %v149
    %v350 = vunpack.c.l.b16 %v150
    %v351 = vunpack.c.l.b16 %v151
    %v352 = vunpack.c.l.b16 %v152
    %v353 = vunpack.c.l.b16 %v153
    %v354 = vunpack.c.l.b16 %v154
    %v355 = vunpack.c.l.b16 %v155
    %v356 = vunpack.c.l.b16 %v156
    %v357 = vunpack.c.l.b16 %v157
    %v358 = vunpack.c.l.b16 %v158
    %v359 = vunpack.c.l.b16 %v159
    %v360 = vunpack.c.l.b16 %v160
    %v361 = vunpack.c.l.b16 %v161
    %v362 = vunpack.c.l.b16 %v162
    %v363 = vunpack.c.l.b16 %v163
    %v364 = vunpack.c.l.b16 %v164
    %v365 = vunpack.c.l.b16 %v165
    %v366 = vunpack.c.l.b16 %v166
    %v367 = vunpack.c.l.b16 %v167
    %v368 = vunpack.c.l.b16 %v168
    %v369 = vunpack.c.l.b16 %v169
    %v370 = vunpack.c.l.b16 %v170
    %v371 = vunpack.c.l.b16 %v171
    %v372 = vunpack.c.l.b16 %v172
    %v373 = vunpack.c.l.b16 %v173
    %v374 = vunpack.c.l.b16 %v174
    %v375 = vunpack.c.l.b16 %v175
    %v376 = vunpack.c.l.b16 %v176
    %v377 = vunpack.c.l.b16 %v177
    %v378 = vunpack.c.l.b16 %v178
    %v379 = vunpack.c.l.b16 %v179
    %v380 = vunpack.c.l.b16 %v180
    %v381 = vunpack.c.l.b16 %v181
    %v382 = vunpack.c.l.b16 %v182
    %v383 = vunpack.c.l.b16 %v183
    %v384 = vunpack.c.l.b16 %v184
    %v385 = vunpack.c.l.b16 %v185
    %v386 = vunpack.c.l.b16 %v186
    %v387 = vunpack.c.l.b16 %v187
    %v388 = vunpack.c.l.b16 %v188
    %v389 = vunpack.c.l.b16 %v189
    %v390 = vunpack.c.l.b16 %v190
    %v391 = vunpack.c.l.b16 %v191
    %v392 = vunpack.c.l.b16 %v192
    %v393 = vunpack.c.l.b16 %v193
    %v394 = vunpack.c.l.b16 %v194
    %v395 = vunpack.c.l.b16 %v195
    %v396 = vunpack.c.l.b16 %v196
    %v397 = vunpack.c.l.b16 %v197
    %v398 = vunpack.c.l.b16 %v198
    %v399 = vunpack.c.l.b16 %v199
    %v400 = vunpack.c.l.b16 %v200
    %v401 = vunpack.c.l.b16 %v201
    %v402 = vunpack.c.l.b16 %v202
    %v403 = vunpack.c.l.b16 %v203
    %v404 = vunpack.c.l.b16 %v204
    %v405 = vunpack.c.l.b16 %v205
    %v406 = vunpack.c.l.b16 %v206
    %v407 = vunpack.c.l.b16 %v207
    %v408 = vunpack.c.l.b16 %v208
    %v409 = vunpack.c.l.b16 %v209
    %v410 = vunpack.c.l.b16 %v210
    %v411 = vunpack.c.l.b16 %v211
    %v412 = vunpack.c.l.b16 %v212
    %v413 = vunpack.c.l.b16 %v213
    %v414 = vunpack.c.l.b16 %v214
    %v415 = vunpack.c.l.b16 %v215
    %v416 = vunpack.c.l.b16 %v216
    %v417 = vunpack.c.l.b16 %v217
    %v418 = vunpack.c.l.b16 %v218
    %v419 = vunpack.c.l.b16 %v219
    %v420 = vunpack.c.l.b16 %v220
    %v421 = vunpack.c.l.b16 %v221
    %v422 = vunpack.c.l.b16 %v222
    %v423 = vunpack.c.l.b16 %v223
    %v424 = vunpack.c.l.b16 %v224
    %v425 = vunpack.c.l.b16 %v225
    %v426 = vunpack.c.l.b16 %v226
    %v427 = vunpack.c.l.b16 %v227
    %v428 = vunpack.c.l.b16 %v228
    %v429 = vunpack.c.l.b16 %v229
    %v430 = vpack.c.b16 %v333, %v332
    %v431 = vpack.c.b16 %v335, %v334
    %v432 = vpack.c.b16 %v337, %v336
    %v433 = vpack.c.b16 %v339, %v338
    %v434 = vpack.c.b16 %v341, %v340
    %v435 = vpack.c.b16 %v343, %v342
    %v436 = vpack.c.b16 %v345, %v344
    %v437 = vpack.c.b16 %v347, %v346
    %v438 = vpack.c.b16 %v349, %v348
    %v439 = vpack.c.b16 %v351, %v350
    %v440 = vpack.c.b16 %v353, %v352
    %v441 = vpack.c.b16 %v355, %v354
    %v442 = vpack.c.b16 %v357, %v356
    %v443 = vpack.c.b16 %v359, %v358
    %v444 = vpack.c.b16 %v361, %v360
    %v445 = vpack.c.b16 %v363, %v362
    %v446 = vpack.c.b16 %v365, %v364
    %v447 = vpack.c.b16 %v367, %v366
    %v448 = vpack.c.b16 %v369, %v368
    %v449 = vpack.c.b16 %v371, %v370
    %v450 = vpack.c.b16 %v373, %v372
    %v451 = vpack.c.b16 %v375, %v374
    %v452 = vpack.c.b16 %v377, %v376
    %v453 = vpack.c.b16 %v379, %v378
    %v454 = vpack.c.b16 %v381, %v380
    %v455 = vpack.c.b16 %v383, %v382
    %v456 = vpack.c.b16 %v385, %v384
    %v457 = vpack.c.b16 %v387, %v386
    %v458 = vpack.c.b16 %v389, %v388
    %v459 = vpack.c.b16 %v391, %v390
    %v460 = vpack.c.b16 %v393, %v392
    %v461 = vpack.c.b16 %v395, %v394
    %v462 = vpack.c.b16 %v397, %v396
    %v463 = vpack.c.b16 %v399, %v398
    %v464 = vpack.c.b16 %v401, %v400
    %v465 = vpack.c.b16 %v403, %v402
    %v466 = vpack.c.b16 %v405, %v404
    %v467 = vpack.c.b16 %v407, %v406
    %v468 = vpack.c.b16 %v409, %v408
    %v469 = vpack.c.b16 %v411, %v410
    %v470 = vpack.c.b16 %v413, %v412
    %v471 = vpack.c.b16 %v415, %v414
    %v472 = vpack.c.b16 %v417, %v416
    %v473 = vpack.c.b16 %v419, %v418
    %v474 = vpack.c.b16 %v421, %v420
    %v475 = vpack.c.b16 %v423, %v422
    %v476 = vpack.c.b16 %v425, %v424
    %v477 = vpack.c.b16 %v427, %v426
    %v478 = vpack.c.b16 %v429, %v428
    %vm528 = vcmask 130048
    %v530 = vsel %vm528, %v110, 0
    %v533 = vsel %vm528, %v117, 0
    %v536 = vsel %vm528, %v124, 0
    %v539 = vsel %vm528, %v131, 0
    %541 = vmatpush.bf16.msra.mxu0 %v437
    %542 = vmatpush.bf16.msra.mxu0 %v436
    %543 = vmatpush.bf16.msra.mxu0 %v435
    %544 = vmatpush.bf16.msra.mxu0 %v434
    %545 = vmatpush.bf16.msra.mxu0 %v433
    %546 = vmatpush.bf16.msra.mxu0 %v432
    %547 = vmatpush.bf16.msra.mxu0 %v431
    %548 = vmatpush.bf16.msra.mxu0 %v430
    %549 = vmatmul.bf16.gmra.mxu0 %v104
    %v550 = vpop.f32.mrf.mxu0
    %v551 = vadd.f32 %v232, %v550
    %v552 = vpop.f32.mrf.mxu0
    %v553 = vadd.f32 %v232, %v552
    %554 = vmatmul.bf16.gmra.mxu0 %v111
    %v555 = vpop.f32.mrf.mxu0
    %v556 = vadd.f32 %v232, %v555
    %v557 = vpop.f32.mrf.mxu0
    %v558 = vadd.f32 %v232, %v557
    %559 = vmatmul.bf16.gmra.mxu0 %v118
    %v560 = vpop.f32.mrf.mxu0
    %v561 = vadd.f32 %v232, %v560
    %v562 = vpop.f32.mrf.mxu0
    %v563 = vadd.f32 %v232, %v562
    %564 = vmatmul.bf16.gmra.mxu0 %v125
    %v565 = vpop.f32.mrf.mxu0
    %v566 = vadd.f32 %v232, %v565
    %v567 = vpop.f32.mrf.mxu0
    %v568 = vadd.f32 %v232, %v567
    %569 = vdwg.mxu0
    %570 = vmatpush.bf16.msra.mxu0 %v445
    %571 = vmatpush.bf16.msra.mxu0 %v444
    %572 = vmatpush.bf16.msra.mxu0 %v443
    %573 = vmatpush.bf16.msra.mxu0 %v442
    %574 = vmatpush.bf16.msra.mxu0 %v441
    %575 = vmatpush.bf16.msra.mxu0 %v440
    %576 = vmatpush.bf16.msra.mxu0 %v439
    %577 = vmatpush.bf16.msra.mxu0 %v438
    %578 = vmatmul.bf16.gmra.mxu0 %v105
    %v579 = vpop.f32.mrf.mxu0
    %v580 = vadd.f32 %v551, %v579
    %v581 = vpop.f32.mrf.mxu0
    %v582 = vadd.f32 %v553, %v581
    %583 = vmatmul.bf16.gmra.mxu0 %v112
    %v584 = vpop.f32.mrf.mxu0
    %v585 = vadd.f32 %v556, %v584
    %v586 = vpop.f32.mrf.mxu0
    %v587 = vadd.f32 %v558, %v586
    %588 = vmatmul.bf16.gmra.mxu0 %v119
    %v589 = vpop.f32.mrf.mxu0
    %v590 = vadd.f32 %v561, %v589
    %v591 = vpop.f32.mrf.mxu0
    %v592 = vadd.f32 %v563, %v591
    %593 = vmatmul.bf16.gmra.mxu0 %v126
    %v594 = vpop.f32.mrf.mxu0
    %v595 = vadd.f32 %v566, %v594
    %v596 = vpop.f32.mrf.mxu0
    %v597 = vadd.f32 %v568, %v596
    %598 = vdwg.mxu0
    %599 = vmatpush.bf16.msra.mxu0 %v453
    %600 = vmatpush.bf16.msra.mxu0 %v452
    %601 = vmatpush.bf16.msra.mxu0 %v451
    %602 = vmatpush.bf16.msra.mxu0 %v450
    %603 = vmatpush.bf16.msra.mxu0 %v449
    %604 = vmatpush.bf16.msra.mxu0 %v448
    %605 = vmatpush.bf16.msra.mxu0 %v447
    %606 = vmatpush.bf16.msra.mxu0 %v446
    %607 = vmatmul.bf16.gmra.mxu0 %v106
    %v608 = vpop.f32.mrf.mxu0
    %v609 = vadd.f32 %v580, %v608
    %v610 = vpop.f32.mrf.mxu0
    %v611 = vadd.f32 %v582, %v610
    %612 = vmatmul.bf16.gmra.mxu0 %v113
    %v613 = vpop.f32.mrf.mxu0
    %v614 = vadd.f32 %v585, %v613
    %v615 = vpop.f32.mrf.mxu0
    %v616 = vadd.f32 %v587, %v615
    %617 = vmatmul.bf16.gmra.mxu0 %v120
    %v618 = vpop.f32.mrf.mxu0
    %v619 = vadd.f32 %v590, %v618
    %v620 = vpop.f32.mrf.mxu0
    %v621 = vadd.f32 %v592, %v620
    %622 = vmatmul.bf16.gmra.mxu0 %v127
    %v623 = vpop.f32.mrf.mxu0
    %v624 = vadd.f32 %v595, %v623
    %v625 = vpop.f32.mrf.mxu0
    %v626 = vadd.f32 %v597, %v625
    %627 = vdwg.mxu0
    %628 = vmatpush.bf16.msra.mxu0 %v461
    %629 = vmatpush.bf16.msra.mxu0 %v460
    %630 = vmatpush.bf16.msra.mxu0 %v459
    %631 = vmatpush.bf16.msra.mxu0 %v458
    %632 = vmatpush.bf16.msra.mxu0 %v457
    %633 = vmatpush.bf16.msra.mxu0 %v456
    %634 = vmatpush.bf16.msra.mxu0 %v455
    %635 = vmatpush.bf16.msra.mxu0 %v454
    %636 = vmatmul.bf16.gmra.mxu0 %v107
    %v637 = vpop.f32.mrf.mxu0
    %v638 = vadd.f32 %v609, %v637
    %v639 = vpop.f32.mrf.mxu0
    %v640 = vadd.f32 %v611, %v639
    %641 = vmatmul.bf16.gmra.mxu0 %v114
    %v642 = vpop.f32.mrf.mxu0
    %v643 = vadd.f32 %v614, %v642
    %v644 = vpop.f32.mrf.mxu0
    %v645 = vadd.f32 %v616, %v644
    %646 = vmatmul.bf16.gmra.mxu0 %v121
    %v647 = vpop.f32.mrf.mxu0
    %v648 = vadd.f32 %v619, %v647
    %v649 = vpop.f32.mrf.mxu0
    %v650 = vadd.f32 %v621, %v649
    %651 = vmatmul.bf16.gmra.mxu0 %v128
    %v652 = vpop.f32.mrf.mxu0
    %v653 = vadd.f32 %v624, %v652
    %v654 = vpop.f32.mrf.mxu0
    %v655 = vadd.f32 %v626, %v654
    %656 = vdwg.mxu0
    %657 = vmatpush.bf16.msra.mxu0 %v469
    %658 = vmatpush.bf16.msra.mxu0 %v468
    %659 = vmatpush.bf16.msra.mxu0 %v467
    %660 = vmatpush.bf16.msra.mxu0 %v466
    %661 = vmatpush.bf16.msra.mxu0 %v465
    %662 = vmatpush.bf16.msra.mxu0 %v464
    %663 = vmatpush.bf16.msra.mxu0 %v463
    %664 = vmatpush.bf16.msra.mxu0 %v462
    %665 = vmatmul.bf16.gmra.mxu0 %v108
    %v666 = vpop.f32.mrf.mxu0
    %v667 = vadd.f32 %v638, %v666
    %v668 = vpop.f32.mrf.mxu0
    %v669 = vadd.f32 %v640, %v668
    %670 = vmatmul.bf16.gmra.mxu0 %v115
    %v671 = vpop.f32.mrf.mxu0
    %v672 = vadd.f32 %v643, %v671
    %v673 = vpop.f32.mrf.mxu0
    %v674 = vadd.f32 %v645, %v673
    %675 = vmatmul.bf16.gmra.mxu0 %v122
    %v676 = vpop.f32.mrf.mxu0
    %v677 = vadd.f32 %v648, %v676
    %v678 = vpop.f32.mrf.mxu0
    %v679 = vadd.f32 %v650, %v678
    %680 = vmatmul.bf16.gmra.mxu0 %v129
    %v681 = vpop.f32.mrf.mxu0
    %v682 = vadd.f32 %v653, %v681
    %v683 = vpop.f32.mrf.mxu0
    %v684 = vadd.f32 %v655, %v683
    %685 = vdwg.mxu0
    %686 = vmatpush.bf16.msra.mxu0 %v477
    %687 = vmatpush.bf16.msra.mxu0 %v476
    %688 = vmatpush.bf16.msra.mxu0 %v475
    %689 = vmatpush.bf16.msra.mxu0 %v474
    %690 = vmatpush.bf16.msra.mxu0 %v473
    %691 = vmatpush.bf16.msra.mxu0 %v472
    %692 = vmatpush.bf16.msra.mxu0 %v471
    %693 = vmatpush.bf16.msra.mxu0 %v470
    %694 = vmatmul.bf16.gmra.mxu0 %v109
    %v695 = vpop.f32.mrf.mxu0
    %v696 = vadd.f32 %v667, %v695
    %v697 = vpop.f32.mrf.mxu0
    %v698 = vadd.f32 %v669, %v697
    %699 = vmatmul.bf16.gmra.mxu0 %v116
    %v700 = vpop.f32.mrf.mxu0
    %v701 = vadd.f32 %v672, %v700
    %v702 = vpop.f32.mrf.mxu0
    %v703 = vadd.f32 %v674, %v702
    %704 = vmatmul.bf16.gmra.mxu0 %v123
    %v705 = vpop.f32.mrf.mxu0
    %v706 = vadd.f32 %v677, %v705
    %v707 = vpop.f32.mrf.mxu0
    %v708 = vadd.f32 %v679, %v707
    %709 = vmatmul.bf16.gmra.mxu0 %v130
    %v710 = vpop.f32.mrf.mxu0
    %v711 = vadd.f32 %v682, %v710
    %v712 = vpop.f32.mrf.mxu0
    %v713 = vadd.f32 %v684, %v712
    %714 = vdwg.mxu0
    %715 = vmatpush.bf16.msra.mxu0 0
    %716 = vmatpush.bf16.msra.mxu0 0
    %717 = vmatpush.bf16.msra.mxu0 0
    %718 = vmatpush.bf16.msra.mxu0 0
    %719 = vmatpush.bf16.msra.mxu0 0
    %720 = vmatpush.bf16.msra.mxu0 0
    %721 = vmatpush.bf16.msra.mxu0 0
    %722 = vmatpush.bf16.msra.mxu0 %v478
    %723 = vmatmul.bf16.gmra.mxu0 %v530
    %v724 = vpop.f32.mrf.mxu0
    %v725 = vadd.f32 %v696, %v724
    %v726 = vpop.f32.mrf.mxu0
    %v727 = vadd.f32 %v698, %v726
    %728 = vmatmul.bf16.gmra.mxu0 %v533
    %v729 = vpop.f32.mrf.mxu0
    %v730 = vadd.f32 %v701, %v729
    %v731 = vpop.f32.mrf.mxu0
    %v732 = vadd.f32 %v703, %v731
    %733 = vmatmul.bf16.gmra.mxu0 %v536
    %v734 = vpop.f32.mrf.mxu0
    %v735 = vadd.f32 %v706, %v734
    %v736 = vpop.f32.mrf.mxu0
    %v737 = vadd.f32 %v708, %v736
    %738 = vmatmul.bf16.gmra.mxu0 %v539
    %v739 = vpop.f32.mrf.mxu0
    %v740 = vadd.f32 %v711, %v739
    %v741 = vpop.f32.mrf.mxu0
    %v742 = vadd.f32 %v713, %v741
    %743 = vdwg.mxu0
    %v744 = vmax.f32 %v725, 0.0
    %v745 = vmax.f32 %v727, 0.0
    %v746 = vmax.f32 %v730, 0.0
    %v747 = vmax.f32 %v732, 0.0
    %v748 = vmax.f32 %v735, 0.0
    %v749 = vmax.f32 %v737, 0.0
    %v750 = vmax.f32 %v740, 0.0
    %v751 = vmax.f32 %v742, 0.0
    %752 = vst [vmem:[#allocation7] sm:$0xff] %v744
    %753 = vst [vmem:[#allocation7 + $0x8] sm:$0xff] %v745
    %754 = vst [vmem:[#allocation7 + $0x10] sm:$0xff] %v746
    %755 = vst [vmem:[#allocation7 + $0x18] sm:$0xff] %v747
    %756 = vst [vmem:[#allocation7 + $0x20] sm:$0xff] %v748
    %757 = vst [vmem:[#allocation7 + $0x28] sm:$0xff] %v749
    %758 = vst [vmem:[#allocation7 + $0x30] sm:$0xff] %v750
    %759 = vst [vmem:[#allocation7 + $0x38] sm:$0xff] %v751
    // Predicated region
    $region22: #{tpu_custom_call.1} parent=1 // pred_check
      _
    $region23: #{tpu_custom_call.1} parent=1 // pred_check_branch
      %761 = sbr.rel (0) target = $region25
    $region24: #{tpu_custom_call.1} parent=1 // pred_region
      %763 = vsyncadd [#allocation4], 0
      %s764 = sshll.u32 [#allocation7], 4
      %s765 = int_to_ptr.vmem [resolvable:$true] %s764
      %s766 = sshll.u32 %s3, 4
      %s767 = int_to_ptr.hbm [resolvable:$true] %s766
      %772 = dma.vmem_to_hbm [thread:$0]  %s765, 1024, %s767, [#allocation4], 128, 128, 8
    $region25: #{tpu_custom_call.1} parent=1 // pred_fallthru
      _
    // Predicated region
    $region26: #{tpu_custom_call.1} parent=1 // pred_check
      _
    $region27: #{tpu_custom_call.1} parent=1 // pred_check_branch
      %774 = sbr.rel (0) target = $region29
    $region28: #{tpu_custom_call.1} parent=1 // pred_region
      %776 = dma.done [#allocation4], 1024
    $region29: #{tpu_custom_call.1} parent=1 // pred_fallthru
      _
    %777 = vsyncpa [#allocation3], 1
    %778 = vsyncpa [#allocation6], 1
    %779 = vsyncpa [#allocation4], 1

</llo_original>
